<compile_context>
chip_gen: v5e
topology: v5e:2x2
jax: 0.10.0
libtpu: 0.0.40
codegen_flags: <defaults>
</compile_context>

<pallas_src>
import functools
import math

import jax
import jax.numpy as jnp
import numpy as np
from jax import lax
from jax.experimental import pallas as pl
from jax.experimental.pallas import tpu as pltpu


def _detect_num_tensorcores():
    """Best-effort TensorCores-per-chip count (2 on v7x-class parts, else 1)."""
    try:
        info = pltpu.get_tpu_info()
    except Exception:
        return 1
    for name in ("num_cores_per_chip", "cores_per_chip", "num_tensorcores",
                 "tensorcore_count", "num_cores", "core_count"):
        val = getattr(info, name, None)
        if isinstance(val, (int, np.integer)) and 1 <= int(val) <= 8:
            return int(val)
    return 1


def _l2mae_kernel(x_ref, t_ref, ones_ref, o_ref, acc_ref, *,
                  scale, n_packed, tile_n, n_blocks, inner_steps,
                  mask_tail, gate_range):
    c = pl.program_id(0)   # chunk (a TensorCore on multi-core parts)
    k = pl.program_id(1)   # sequential reduction step within the chunk

    @pl.when(k == 0)
    def _():
        acc_ref[0, 0] = 0.0

    # Upcast before any arithmetic (keeps the VPU path legal on v5e and
    # preserves accuracy for bf16 inputs).
    x = x_ref[...].astype(jnp.float32)
    t = t_ref[...].astype(jnp.float32)
    diff = x - t
    # Per-original-row squared L2 norms, recovered lane-densely via a
    # block-diagonal ones matmul on the otherwise-idle MXU: (tile_n, R).
    sq = jnp.dot(diff * diff, ones_ref[...],
                 preferred_element_type=jnp.float32)
    dists = jnp.sqrt(sq)

    block_idx = c * inner_steps + k

    if mask_tail:
        # Interior blocks: unmasked fast path (also skips clamped duplicate
        # blocks, whose block_idx >= n_blocks).
        @pl.when(block_idx < n_blocks - 1)
        def _():
            acc_ref[0, 0] += jnp.sum(dists)

        # Tail block only: mask packed rows past n_packed (their VMEM
        # contents are undefined).  jnp.where is a true select, so Inf/NaN
        # from sqrt(garbage) never reaches the sum.
        @pl.when(block_idx == n_blocks - 1)
        def _():
            rows = lax.broadcasted_iota(jnp.int32, dists.shape, 0)
            n_valid = n_packed - (n_blocks - 1) * tile_n   # static
            acc_ref[0, 0] += jnp.sum(jnp.where(rows < n_valid, dists, 0.0))
    elif gate_range:
        @pl.when(block_idx < n_blocks)
        def _():
            acc_ref[0, 0] += jnp.sum(dists)
    else:
        acc_ref[0, 0] += jnp.sum(dists)

    @pl.when(k == inner_steps - 1)
    def _():
        o_ref[0, 0] = acc_ref[0, 0] * scale


def l2mae_loss(x, t, *, reduction="mean", num_chunks=None,
               target_block_bytes=4 << 20, max_packed_lanes=4096):
    """Pallas TPU implementation of L2MAELoss.forward."""
    assert reduction in ("mean", "sum")
    assert x.shape == t.shape and x.ndim >= 1
    d = x.shape[-1]
    x2 = x.reshape(-1, d)
    t2 = t.reshape(-1, d)
    n = x2.shape[0]
    assert n > 0
    itemsize = x.dtype.itemsize

    # ---- lane packing: R consecutive rows become one packed row of R*d lanes.
    r = 128 // math.gcd(d, 128)
    if r * d > max_packed_lanes:
        r = 1            # huge awkward feature dim: plain row-per-sublane layout
    width = r * d

    # Pad the row count so (a) the packed reshape is exact and (b) there are at
    # least 8 packed rows (one sublane tile).  Padded rows are zeros in both
    # operands => zero distance => no contribution to the sum.
    n_pad = n + ((-n) % r)
    if n_pad // r < 8:
        n_pad = 8 * r
    if n_pad != n:
        pad = n_pad - n
        x2 = jnp.pad(x2, ((0, pad), (0, 0)))
        t2 = jnp.pad(t2, ((0, pad), (0, 0)))
    n_packed = n_pad // r
    assert n_pad * d < 2 ** 31   # int32 index math in the kernel

    xp = x2.reshape(n_packed, width)
    tp = t2.reshape(n_packed, width)

    # Block-diagonal ones matrix: column p selects the d features of sub-row p.
    cols = np.arange(width)
    ones_bd = jnp.asarray((cols[:, None] // d) == np.arange(r)[None, :],
                          dtype=jnp.float32)

    # ---- tile sizing: dtype-aware, ~target_block_bytes per input block.
    tile_n = max(8, (target_block_bytes // (width * itemsize)) // 8 * 8)
    tile_n = min(tile_n, (n_packed // 8) * 8)
    n_blocks = pl.cdiv(n_packed, tile_n)

    if num_chunks is None:
        num_chunks = _detect_num_tensorcores()
    num_chunks = max(1, min(int(num_chunks), n_blocks))
    inner = pl.cdiv(n_blocks, num_chunks)

    mask_tail = (n_packed % tile_n) != 0          # partial tail block exists
    gate_range = (num_chunks * inner) > n_blocks  # clamped duplicate blocks exist

    # torch.mean over dists (shape = input.shape[:-1]) => divide by true n rows.
    scale = (1.0 / n) if reduction == "mean" else 1.0

    kernel = functools.partial(
        _l2mae_kernel, scale=scale, n_packed=n_packed, tile_n=tile_n,
        n_blocks=n_blocks, inner_steps=inner, mask_tail=mask_tail,
        gate_range=gate_range)

    def in_map(c, k):
        # Clamp so duplicated trailing iterations re-read the last valid block
        # (their contribution is skipped inside the kernel).
        return (jnp.minimum(c * inner + k, n_blocks - 1), 0)

    partials = pl.pallas_call(
        kernel,
        out_shape=jax.ShapeDtypeStruct((num_chunks, 1), jnp.float32),
        grid_spec=pltpu.PrefetchScalarGridSpec(
            num_scalar_prefetch=0,
            grid=(num_chunks, inner),
            in_specs=[
                pl.BlockSpec((tile_n, width), in_map),
                pl.BlockSpec((tile_n, width), in_map),
                pl.BlockSpec((width, r), lambda c, k: (0, 0)),
            ],
            out_specs=pl.BlockSpec((1, 1), lambda c, k: (c, 0),
                                   memory_space=pltpu.SMEM),
            scratch_shapes=[pltpu.SMEM((1, 1), jnp.float32)],
        ),
        compiler_params=pltpu.CompilerParams(
            dimension_semantics=("parallel", "arbitrary"),
            vmem_limit_bytes=64 * 1024 * 1024),
    )(xp, tp, ones_bd)

    # Combine per-chunk partial sums (scale already applied in-kernel).
    return jnp.sum(partials)


if __name__ == "__main__":
    key = jax.random.PRNGKey(0)
    kx, kt = jax.random.split(key)

    # 1) forces-like input (batch, atoms, 3): the primary mdsim L2MAELoss use
    #    case; exercises the lane-packed path (R = 128 rows per packed row).
    x = jax.random.normal(kx, (4, 37, 3), dtype=jnp.float32)
    t = jax.random.normal(kt, (4, 37, 3), dtype=jnp.float32)
    loss = l2mae_loss(x, t, reduction="mean")
    jax.block_until_ready(loss)
    ref = jnp.mean(jnp.linalg.norm(x - t, axis=-1))
    np.testing.assert_allclose(np.asarray(loss), np.asarray(ref),
                               rtol=1e-5, atol=1e-6)

    # 2) feature dim a multiple of 128 (R = 1 path), reduction='sum'.
    x2 = jax.random.normal(kx, (200, 128), dtype=jnp.float32)
    t2 = jax.random.normal(kt, (200, 128), dtype=jnp.float32)
    loss2 = l2mae_loss(x2, t2, reduction="sum")
    jax.block_until_ready(loss2)
    ref2 = jnp.sum(jnp.linalg.norm(x2 - t2, axis=-1))
    np.testing.assert_allclose(np.asarray(loss2), np.asarray(ref2),
                               rtol=1e-5, atol=1e-4)

    # 3) multi-block + gated tail mask + chunked (duplicate-block) path,
    #    forced with tiny blocks and num_chunks=3.
    x3 = jax.random.normal(kx, (1000, 16), dtype=jnp.float32)
    t3 = jax.random.normal(kt, (1000, 16), dtype=jnp.float32)
    loss3 = l2mae_loss(x3, t3, reduction="mean", num_chunks=3,
                       target_block_bytes=4096)
    jax.block_until_ready(loss3)
    ref3 = jnp.mean(jnp.linalg.norm(x3 - t3, axis=-1))
    np.testing.assert_allclose(np.asarray(loss3), np.asarray(ref3),
                               rtol=1e-5, atol=1e-6)

    # 4) bf16 inputs (dtype-aware tiling; kernel upcasts to f32 internally).
    x4 = jax.random.normal(kx, (256, 64), dtype=jnp.float32).astype(jnp.bfloat16)
    t4 = jax.random.normal(kt, (256, 64), dtype=jnp.float32).astype(jnp.bfloat16)
    loss4 = l2mae_loss(x4, t4, reduction="mean")
    jax.block_until_ready(loss4)
    ref4 = jnp.mean(jnp.linalg.norm(x4.astype(jnp.float32) -
                                    t4.astype(jnp.float32), axis=-1))
    np.testing.assert_allclose(np.asarray(loss4), np.asarray(ref4),
                               rtol=1e-5, atol=1e-5)

    print("KERNEL_OK")
</pallas_src>

<mosaic_0001>
module attributes {stable_mosaic.version = 11 : i64} {
  func.func @_l2mae_kernel(%arg0: i32, %arg1: i32, %arg2: memref<8x384xf32, #tpu.memory_space<vmem>>, %arg3: memref<8x384xf32, #tpu.memory_space<vmem>>, %arg4: memref<384x128xf32, #tpu.memory_space<vmem>>, %arg5: memref<1x1xf32, #tpu.memory_space<smem>>, %arg6: memref<1x1xf32, #tpu.memory_space<smem>>) attributes {dimension_semantics = [#tpu.dimension_semantics<parallel>, #tpu.dimension_semantics<arbitrary>], iteration_bounds = array<i64: 1, 1>, scalar_prefetch = 0 : i64, scratch_operands = 1 : i64, tpu.core_type = #tpu.core_type<tc>, window_params = [{transform_indices = @transform_0, window_bounds = array<i64: 8, 384>}, {transform_indices = @transform_1, window_bounds = array<i64: 8, 384>}, {pipeline_mode = #tpu.pipeline_mode<synchronous>, transform_indices = @transform_2, window_bounds = array<i64: 384, 128>}, {transform_indices = @transform_3, window_bounds = array<i64: 1, 1>}]} {
    %c0_i32 = arith.constant 0 : i32
    %0 = arith.cmpi eq, %arg1, %c0_i32 : i32
    %1 = arith.extui %0 : i1 to i32
    %c0_i32_0 = arith.constant 0 : i32
    %2 = arith.cmpi ne, %1, %c0_i32_0 : i32
    scf.if %2 {
      %cst_13 = arith.constant 0.000000e+00 : f32
      %c0_14 = arith.constant 0 : index
      %c0_15 = arith.constant 0 : index
      %20 = memref.load %arg6[%c0_14, %c0_15] : memref<1x1xf32, #tpu.memory_space<smem>>
      memref.store %cst_13, %arg6[%c0_14, %c0_15] : memref<1x1xf32, #tpu.memory_space<smem>>
    } else {
    }
    %c0 = arith.constant 0 : index
    %c0_1 = arith.constant 0 : index
    %3 = vector.load %arg2[%c0, %c0_1] : memref<8x384xf32, #tpu.memory_space<vmem>>, vector<8x384xf32>
    %c0_2 = arith.constant 0 : index
    %c0_3 = arith.constant 0 : index
    %4 = vector.load %arg3[%c0_2, %c0_3] : memref<8x384xf32, #tpu.memory_space<vmem>>, vector<8x384xf32>
    %5 = arith.subf %3, %4 : vector<8x384xf32>
    %6 = arith.mulf %5, %5 : vector<8x384xf32>
    %c0_4 = arith.constant 0 : index
    %c0_5 = arith.constant 0 : index
    %7 = vector.load %arg4[%c0_4, %c0_5] : memref<384x128xf32, #tpu.memory_space<vmem>>, vector<384x128xf32>
    %cst = arith.constant dense<0.000000e+00> : vector<8x128xf32>
    %8 = tpu.matmul %6, %7, %cst {dimension_numbers = #tpu.dot_dimension_numbers<[1], [0], [0], [1], [0, 0, 1, 1], [], []>} : vector<8x384xf32>, vector<384x128xf32>, vector<8x128xf32> -> vector<8x128xf32>
    %9 = math.sqrt %8 : vector<8x128xf32>
    %c0_6 = arith.constant 0 : index
    %c0_7 = arith.constant 0 : index
    %10 = memref.load %arg6[%c0_6, %c0_7] : memref<1x1xf32, #tpu.memory_space<smem>>
    %11 = vector.shape_cast %9 : vector<8x128xf32> to vector<1x8x128xf32>
    %cst_8 = arith.constant dense<0.000000e+00> : vector<1xf32>
    %12 = vector.multi_reduction <add>, %11, %cst_8 [1, 2] : vector<1x8x128xf32> to vector<1xf32>
    %13 = vector.shape_cast %12 : vector<1xf32> to vector<1x1x1xf32>
    %14 = vector.extract %13[0, 0, 0] : f32 from vector<1x1x1xf32>
    %15 = arith.addf %10, %14 : f32
    %c0_9 = arith.constant 0 : index
    %c0_10 = arith.constant 0 : index
    %16 = memref.load %arg6[%c0_9, %c0_10] : memref<1x1xf32, #tpu.memory_space<smem>>
    memref.store %15, %arg6[%c0_9, %c0_10] : memref<1x1xf32, #tpu.memory_space<smem>>
    %c0_i32_11 = arith.constant 0 : i32
    %17 = arith.cmpi eq, %arg1, %c0_i32_11 : i32
    %18 = arith.extui %17 : i1 to i32
    %c0_i32_12 = arith.constant 0 : i32
    %19 = arith.cmpi ne, %18, %c0_i32_12 : i32
    scf.if %19 {
      %c0_13 = arith.constant 0 : index
      %c0_14 = arith.constant 0 : index
      %20 = memref.load %arg6[%c0_13, %c0_14] : memref<1x1xf32, #tpu.memory_space<smem>>
      %cst_15 = arith.constant 0.00675675692 : f32
      %21 = arith.mulf %20, %cst_15 : f32
      %c0_16 = arith.constant 0 : index
      %c0_17 = arith.constant 0 : index
      %22 = memref.load %arg5[%c0_16, %c0_17] : memref<1x1xf32, #tpu.memory_space<smem>>
      memref.store %21, %arg5[%c0_16, %c0_17] : memref<1x1xf32, #tpu.memory_space<smem>>
    } else {
    }
    return
  }
  func.func @transform_0(%arg0: i32, %arg1: i32) -> (i32, i32) {
    %c1_i32 = arith.constant 1 : i32
    %0 = arith.muli %arg0, %c1_i32 : i32
    %1 = arith.addi %0, %arg1 : i32
    %c0_i32 = arith.constant 0 : i32
    %2 = arith.minsi %1, %c0_i32 : i32
    %c0_i32_0 = arith.constant 0 : i32
    %c0_i32_1 = arith.constant 0 : i32
    return %2, %c0_i32_0 : i32, i32
  }
  func.func @transform_1(%arg0: i32, %arg1: i32) -> (i32, i32) {
    %c1_i32 = arith.constant 1 : i32
    %0 = arith.muli %arg0, %c1_i32 : i32
    %1 = arith.addi %0, %arg1 : i32
    %c0_i32 = arith.constant 0 : i32
    %2 = arith.minsi %1, %c0_i32 : i32
    %c0_i32_0 = arith.constant 0 : i32
    %c0_i32_1 = arith.constant 0 : i32
    return %2, %c0_i32_0 : i32, i32
  }
  func.func @transform_2(%arg0: i32, %arg1: i32) -> (i32, i32) {
    %c0_i32 = arith.constant 0 : i32
    %c0_i32_0 = arith.constant 0 : i32
    %c0_i32_1 = arith.constant 0 : i32
    return %c0_i32, %c0_i32_0 : i32, i32
  }
  func.func @transform_3(%arg0: i32, %arg1: i32) -> (i32, i32) {
    %c0_i32 = arith.constant 0 : i32
    %c0_i32_0 = arith.constant 0 : i32
    return %arg0, %c0_i32 : i32, i32
  }
}

</mosaic_0001>

<llo_original>
// kernel: tpu_custom_call.1
$region0: #{tpu_custom_call.1}
  #allocation0 [shape = 'u32[]', space=smem, size = 0x4, offset = 0x4, fixed_abs, tag = 'smem constant byte address 0x4 - core index']
  #allocation1 [shape = 'u32[72,128]{1,0:T(1,128)}', space=vmem, size = 0x9000, scoped, tag = 'internal scratch']
  #allocation2 [shape = 'f32[1,1]{1,0:T(1,128)}', space=smem, size = 0x200, scoped, tag = 'scratch operand']
  %s0 = inlined_call_operand.hbm [shape: f32[8,384], index: 0, kind: input, shape index: {}]
  %s1 = inlined_call_operand.hbm [shape: f32[8,384], index: 1, kind: input, shape index: {}]
  %s2 = inlined_call_operand.hbm [shape: f32[384,128], index: 2, kind: input, shape index: {}]
  %s3 = inlined_call_operand.hbm [shape: f32[1,1], index: 3, kind: output, shape index: {}]
  %s4 = sld [smem:[#allocation0]]
  $region42: #{tpu_custom_call.1} parent=0
    _
  %s6 = ssub.s32 1, %s4
  %s7 = scalar_select 0, %s6, %s4
  $region1: #{tpu_custom_call.1} parent=0
    #allocation3 [shape = 'u8[12288]{0}', space=vmem, size = 0x3000, scoped, tag = 'input window, operand 0, single buffered']
    #allocation4 [shape = 's32[1]{0}', space=sflag, size = 0x4, scoped, tag = 'scoped memory for tpu_custom_call.1']
    #allocation5 [shape = 's32[1]{0}', space=sflag, size = 0x4, scoped, tag = 'scoped memory for tpu_custom_call.1']
    #allocation6 [shape = 'u8[12288]{0}', space=vmem, size = 0x3000, scoped, tag = 'input window, operand 1, single buffered']
    #allocation7 [shape = 's32[1]{0}', space=sflag, size = 0x4, scoped, tag = 'scoped memory for tpu_custom_call.1']
    #allocation8 [shape = 'u8[196608]{0}', space=vmem, size = 0x30000, scoped, tag = 'input window, operand 2, single buffered']
    #allocation9 [shape = 'u8[512]{0}', space=smem, size = 0x200, scoped, tag = 'output window, operand 0, single buffered']
    %8 = vsyncpa [#allocation4], 0
    %9 = vsyncpa [#allocation7], 0
    %10 = vsyncpa [#allocation5], 0
    // Predicated region
    $region2: #{tpu_custom_call.1} parent=1 // pred_check
      _
    $region3: #{tpu_custom_call.1} parent=1 // pred_check_branch
      %12 = sbr.rel (0) target = $region5
    $region4: #{tpu_custom_call.1} parent=1 // pred_region
      %s13 = sadd.s32 0, 0
      %p14 = scmp.lt.s32.totalorder %s13, 0
      %s15 = scalar_select %p14, %s13, 0
      %17 = vsyncadd [#allocation4], 0
      %s18 = smul.addr %s15, 3
      %s19 = smul.addr %s18, 8
      %s20 = scalar_lea.hbm %s0, %s19
      %s22 = sshll.u32 %s20, 4
      %s23 = int_to_ptr.hbm [resolvable:$true] %s22
      %s24 = sshll.u32 [#allocation3], 4
      %s25 = int_to_ptr.vmem [resolvable:$true] %s24
      %27 = dma.hbm_to_vmem [thread:$0]  %s23, 384, %s25, [#allocation4]
    $region5: #{tpu_custom_call.1} parent=1 // pred_fallthru
      _
    // Predicated region
    $region6: #{tpu_custom_call.1} parent=1 // pred_check
      _
    $region7: #{tpu_custom_call.1} parent=1 // pred_check_branch
      %29 = sbr.rel (0) target = $region9
    $region8: #{tpu_custom_call.1} parent=1 // pred_region
      %s30 = sadd.s32 0, 0
      %p31 = scmp.lt.s32.totalorder %s30, 0
      %s32 = scalar_select %p31, %s30, 0
      %34 = vsyncadd [#allocation7], 0
      %s35 = smul.addr %s32, 3
      %s36 = smul.addr %s35, 8
      %s37 = scalar_lea.hbm %s1, %s36
      %s39 = sshll.u32 %s37, 4
      %s40 = int_to_ptr.hbm [resolvable:$true] %s39
      %s41 = sshll.u32 [#allocation6], 4
      %s42 = int_to_ptr.vmem [resolvable:$true] %s41
      %44 = dma.hbm_to_vmem [thread:$0]  %s40, 384, %s42, [#allocation7]
    $region9: #{tpu_custom_call.1} parent=1 // pred_fallthru
      _
    // Predicated region
    $region10: #{tpu_custom_call.1} parent=1 // pred_check
      _
    $region11: #{tpu_custom_call.1} parent=1 // pred_check_branch
      %46 = sbr.rel (0) target = $region13
    $region12: #{tpu_custom_call.1} parent=1 // pred_region
      %48 = vsyncadd [#allocation7], 0
      %s49 = sshll.u32 %s2, 4
      %s50 = int_to_ptr.hbm [resolvable:$true] %s49
      %s51 = sshll.u32 [#allocation8], 4
      %s52 = int_to_ptr.vmem [resolvable:$true] %s51
      %57 = dma.hbm_to_vmem [thread:$0]  %s50, 6144, %s52, [#allocation7], 128, 128, 8
    $region13: #{tpu_custom_call.1} parent=1 // pred_fallthru
      _
    // Predicated region
    $region14: #{tpu_custom_call.1} parent=1 // pred_check
      _
    $region15: #{tpu_custom_call.1} parent=1 // pred_check_branch
      %59 = sbr.rel (0) target = $region17
    $region16: #{tpu_custom_call.1} parent=1 // pred_region
      %61 = dma.done [#allocation4], 384
    $region17: #{tpu_custom_call.1} parent=1 // pred_fallthru
      _
    // Predicated region
    $region18: #{tpu_custom_call.1} parent=1 // pred_check
      _
    $region19: #{tpu_custom_call.1} parent=1 // pred_check_branch
      %63 = sbr.rel (0) target = $region21
    $region20: #{tpu_custom_call.1} parent=1 // pred_region
      %65 = dma.done [#allocation7], 384
    $region21: #{tpu_custom_call.1} parent=1 // pred_fallthru
      _
    // Predicated region
    $region22: #{tpu_custom_call.1} parent=1 // pred_check
      _
    $region23: #{tpu_custom_call.1} parent=1 // pred_check_branch
      %67 = sbr.rel (0) target = $region25
    $region24: #{tpu_custom_call.1} parent=1 // pred_region
      %69 = dma.done [#allocation7], 6144
    $region25: #{tpu_custom_call.1} parent=1 // pred_fallthru
      _
    %s70 = sadd.s32 0, 0
    %p71 = scmp.lt.s32.totalorder %s70, 0
    %s72 = scalar_select %p71, %s70, 0
    %s73 = sadd.s32 0, 0
    %p74 = scmp.lt.s32.totalorder %s73, 0
    %s75 = scalar_select %p74, %s73, 0
    %p76 = scmp.eq.s32.totalorder 0, 0
    // Predicated region
    $region26: #{tpu_custom_call.1} parent=1 // pred_check
      %p77 = pneg %p76
    $region27: #{tpu_custom_call.1} parent=1 // pred_check_branch
      %79 = sbr.rel (%p77) target = $region29
    $region28: #{tpu_custom_call.1} parent=1 // pred_region
      %s80 = scalar_lea.smem [#allocation2], 0
      %81 = sst [smem:[%s80]] 0.0
    $region29: #{tpu_custom_call.1} parent=1 // pred_fallthru
      _
    %v82 = vld [vmem:[#allocation3] sm:$0xff]
    %v83 = vld [vmem:[#allocation3 + $0x8] sm:$0xff]
    %v84 = vld [vmem:[#allocation3 + $0x10] sm:$0xff]
    %v85 = vld [vmem:[#allocation6] sm:$0xff]
    %v86 = vld [vmem:[#allocation6 + $0x8] sm:$0xff]
    %v87 = vld [vmem:[#allocation6 + $0x10] sm:$0xff]
    %v88 = vsub.f32 %v82, %v85
    %v89 = vsub.f32 %v83, %v86
    %v90 = vsub.f32 %v84, %v87
    %v91 = vmul.f32 %v88, %v88
    %v92 = vmul.f32 %v89, %v89
    %v93 = vmul.f32 %v90, %v90
    %v94 = vld [vmem:[#allocation8] sm:$0xff]
    %v95 = vld [vmem:[#allocation8 + $0x8] sm:$0xff]
    %v96 = vld [vmem:[#allocation8 + $0x10] sm:$0xff]
    %v97 = vld [vmem:[#allocation8 + $0x18] sm:$0xff]
    %v98 = vld [vmem:[#allocation8 + $0x20] sm:$0xff]
    %v99 = vld [vmem:[#allocation8 + $0x28] sm:$0xff]
    %v100 = vld [vmem:[#allocation8 + $0x30] sm:$0xff]
    %v101 = vld [vmem:[#allocation8 + $0x38] sm:$0xff]
    %v102 = vld [vmem:[#allocation8 + $0x40] sm:$0xff]
    %v103 = vld [vmem:[#allocation8 + $0x48] sm:$0xff]
    %v104 = vld [vmem:[#allocation8 + $0x50] sm:$0xff]
    %v105 = vld [vmem:[#allocation8 + $0x58] sm:$0xff]
    %v106 = vld [vmem:[#allocation8 + $0x60] sm:$0xff]
    %v107 = vld [vmem:[#allocation8 + $0x68] sm:$0xff]
    %v108 = vld [vmem:[#allocation8 + $0x70] sm:$0xff]
    %v109 = vld [vmem:[#allocation8 + $0x78] sm:$0xff]
    %v110 = vld [vmem:[#allocation8 + $0x80] sm:$0xff]
    %v111 = vld [vmem:[#allocation8 + $0x88] sm:$0xff]
    %v112 = vld [vmem:[#allocation8 + $0x90] sm:$0xff]
    %v113 = vld [vmem:[#allocation8 + $0x98] sm:$0xff]
    %v114 = vld [vmem:[#allocation8 + $0xa0] sm:$0xff]
    %v115 = vld [vmem:[#allocation8 + $0xa8] sm:$0xff]
    %v116 = vld [vmem:[#allocation8 + $0xb0] sm:$0xff]
    %v117 = vld [vmem:[#allocation8 + $0xb8] sm:$0xff]
    %v118 = vld [vmem:[#allocation8 + $0xc0] sm:$0xff]
    %v119 = vld [vmem:[#allocation8 + $0xc8] sm:$0xff]
    %v120 = vld [vmem:[#allocation8 + $0xd0] sm:$0xff]
    %v121 = vld [vmem:[#allocation8 + $0xd8] sm:$0xff]
    %v122 = vld [vmem:[#allocation8 + $0xe0] sm:$0xff]
    %v123 = vld [vmem:[#allocation8 + $0xe8] sm:$0xff]
    %v124 = vld [vmem:[#allocation8 + $0xf0] sm:$0xff]
    %v125 = vld [vmem:[#allocation8 + $0xf8] sm:$0xff]
    %v126 = vld [vmem:[#allocation8 + $0x100] sm:$0xff]
    %v127 = vld [vmem:[#allocation8 + $0x108] sm:$0xff]
    %v128 = vld [vmem:[#allocation8 + $0x110] sm:$0xff]
    %v129 = vld [vmem:[#allocation8 + $0x118] sm:$0xff]
    %v130 = vld [vmem:[#allocation8 + $0x120] sm:$0xff]
    %v131 = vld [vmem:[#allocation8 + $0x128] sm:$0xff]
    %v132 = vld [vmem:[#allocation8 + $0x130] sm:$0xff]
    %v133 = vld [vmem:[#allocation8 + $0x138] sm:$0xff]
    %v134 = vld [vmem:[#allocation8 + $0x140] sm:$0xff]
    %v135 = vld [vmem:[#allocation8 + $0x148] sm:$0xff]
    %v136 = vld [vmem:[#allocation8 + $0x150] sm:$0xff]
    %v137 = vld [vmem:[#allocation8 + $0x158] sm:$0xff]
    %v138 = vld [vmem:[#allocation8 + $0x160] sm:$0xff]
    %v139 = vld [vmem:[#allocation8 + $0x168] sm:$0xff]
    %v140 = vld [vmem:[#allocation8 + $0x170] sm:$0xff]
    %v141 = vld [vmem:[#allocation8 + $0x178] sm:$0xff]
    %142 = vmatpush.msra.mxu0 %v109
    %143 = vmatpush.msra.mxu0 %v108
    %144 = vmatpush.msra.mxu0 %v107
    %145 = vmatpush.msra.mxu0 %v106
    %146 = vmatpush.msra.mxu0 %v105
    %147 = vmatpush.msra.mxu0 %v104
    %148 = vmatpush.msra.mxu0 %v103
    %149 = vmatpush.msra.mxu0 %v102
    %150 = vmatpush.msra.mxu0 %v101
    %151 = vmatpush.msra.mxu0 %v100
    %152 = vmatpush.msra.mxu0 %v99
    %153 = vmatpush.msra.mxu0 %v98
    %154 = vmatpush.msra.mxu0 %v97
    %155 = vmatpush.msra.mxu0 %v96
    %156 = vmatpush.msra.mxu0 %v95
    %157 = vmatpush.msra.mxu0 %v94
    %158 = vmatmul.f32.gmra.mxu0 %v91
    %v159 = vpop.f32.mrf.mxu0
    %v160 = vadd.f32 0.0, %v159
    %161 = vdwg.mxu0
    %162 = vmatpush.msra.mxu0 %v125
    %163 = vmatpush.msra.mxu0 %v124
    %164 = vmatpush.msra.mxu0 %v123
    %165 = vmatpush.msra.mxu0 %v122
    %166 = vmatpush.msra.mxu0 %v121
    %167 = vmatpush.msra.mxu0 %v120
    %168 = vmatpush.msra.mxu0 %v119
    %169 = vmatpush.msra.mxu0 %v118
    %170 = vmatpush.msra.mxu0 %v117
    %171 = vmatpush.msra.mxu0 %v116
    %172 = vmatpush.msra.mxu0 %v115
    %173 = vmatpush.msra.mxu0 %v114
    %174 = vmatpush.msra.mxu0 %v113
    %175 = vmatpush.msra.mxu0 %v112
    %176 = vmatpush.msra.mxu0 %v111
    %177 = vmatpush.msra.mxu0 %v110
    %178 = vmatmul.f32.gmra.mxu0 %v92
    %v179 = vpop.f32.mrf.mxu0
    %v180 = vadd.f32 %v160, %v179
    %181 = vdwg.mxu0
    %182 = vmatpush.msra.mxu0 %v141
    %183 = vmatpush.msra.mxu0 %v140
    %184 = vmatpush.msra.mxu0 %v139
    %185 = vmatpush.msra.mxu0 %v138
    %186 = vmatpush.msra.mxu0 %v137
    %187 = vmatpush.msra.mxu0 %v136
    %188 = vmatpush.msra.mxu0 %v135
    %189 = vmatpush.msra.mxu0 %v134
    %190 = vmatpush.msra.mxu0 %v133
    %191 = vmatpush.msra.mxu0 %v132
    %192 = vmatpush.msra.mxu0 %v131
    %193 = vmatpush.msra.mxu0 %v130
    %194 = vmatpush.msra.mxu0 %v129
    %195 = vmatpush.msra.mxu0 %v128
    %196 = vmatpush.msra.mxu0 %v127
    %197 = vmatpush.msra.mxu0 %v126
    %198 = vmatmul.f32.gmra.mxu0 %v93
    %v199 = vpop.f32.mrf.mxu0
    %v200 = vadd.f32 %v180, %v199
    %201 = vdwg.mxu0
    %v202 = vrsqrt.pop %v200
    %v203 = vmul.f32 %v202, %v200
    %v204 = vmul.f32 %v203, %v202
    %v205 = vmul.f32 0.5, %v204
    %v206 = vsub.f32 1.5, %v205
    %v207 = vmul.f32 %v202, %v206
    %v208 = vmul.f32 %v200, %v207
    %vm209 = vcmp.eq.f32.partialorder %v200, inf
    %v210 = vsel %vm209, %v200, %v208
    %vm211 = vcmp.eq.f32.partialorder %v200, 0.0
    %v212 = vand.u32 %v200, 2147483648
    %v213 = vsel %vm211, %v212, %v210
    %s214 = sld [smem:[#allocation2]]
    %215 = vadd.xlane.f32.xlu0 %v213
    %v216 = vpop.xlane.xlu0 %215
    %v217 = vrot.slane %v216, 4
    %v218 = vadd.f32 %v216, %v217
    %v219 = vrot.slane %v218, 2
    %v220 = vadd.f32 %v218, %v219
    %v221 = vrot.slane %v220, 1
    %v222 = vadd.f32 %v220, %v221
    %s223 = vtos %v222
    %s224 = sadd.f32 %s214, %s223
    %s225 = scalar_lea.smem [#allocation2], 0
    %226 = sst [smem:[%s225]] %s224
    // Predicated region
    $region30: #{tpu_custom_call.1} parent=1 // pred_check
      %p227 = pneg %p76
    $region31: #{tpu_custom_call.1} parent=1 // pred_check_branch
      %229 = sbr.rel (%p227) target = $region33
    $region32: #{tpu_custom_call.1} parent=1 // pred_region
      %s230 = sld [smem:[#allocation2]]
      %s231 = smul.f32 %s230, 0.006756757
      %s232 = scalar_lea.smem [#allocation9], 0
      %233 = sst [smem:[%s232]] %s231
    $region33: #{tpu_custom_call.1} parent=1 // pred_fallthru
      _
    // Predicated region
    $region34: #{tpu_custom_call.1} parent=1 // pred_check
      _
    $region35: #{tpu_custom_call.1} parent=1 // pred_check_branch
      %235 = sbr.rel (0) target = $region37
    $region36: #{tpu_custom_call.1} parent=1 // pred_region
      %237 = vsyncadd [#allocation5], 0
      %s239 = sshll.u32 %s3, 4
      %s240 = int_to_ptr.hbm [resolvable:$true] %s239
      %242 = dma.smem_to_hbm [#allocation9], 16, %s240, [#allocation5]
    $region37: #{tpu_custom_call.1} parent=1 // pred_fallthru
      _
    // Predicated region
    $region38: #{tpu_custom_call.1} parent=1 // pred_check
      _
    $region39: #{tpu_custom_call.1} parent=1 // pred_check_branch
      %244 = sbr.rel (0) target = $region41
    $region40: #{tpu_custom_call.1} parent=1 // pred_region
      %246 = dma.done [#allocation5], 16
    $region41: #{tpu_custom_call.1} parent=1 // pred_fallthru
      _
    %247 = sfence
    %248 = vsyncpa [#allocation4], 1
    %249 = vsyncpa [#allocation7], 1
    %250 = vsyncpa [#allocation5], 1

</llo_original>
